<compile_context>
chip_gen: v7x
topology: tpu7x:2x2x1
jax: 0.10.0
libtpu: 0.0.40
codegen_flags: <defaults>
</compile_context>

<pallas_src>
import jax
import jax.numpy as jnp
import numpy as np
from jax import lax
from jax.experimental import pallas as pl
from jax.experimental.pallas import tpu as pltpu

NEG_INF = -1e30  # safe "minus infinity": the diagonal entry is never masked.


# ---------------------- Kernel 1: fused QKV projection ----------------------
def qkv_proj_kernel(x_ref, wqkv_ref, bqkv_ref, q_ref, k_ref, v_ref):
    x = x_ref[0]                                                   # (ts, E)
    q_ref[0] = (jnp.dot(x, wqkv_ref[0], preferred_element_type=jnp.float32)
                + bqkv_ref[0]).astype(q_ref.dtype)
    k_ref[0] = (jnp.dot(x, wqkv_ref[1], preferred_element_type=jnp.float32)
                + bqkv_ref[1]).astype(k_ref.dtype)
    v_ref[0] = (jnp.dot(x, wqkv_ref[2], preferred_element_type=jnp.float32)
                + bqkv_ref[2]).astype(v_ref.dtype)


def qkv_projection(x, wqkv, bqkv, *, block_s=8):
    """x: (B,S,E); wqkv: (3,E,E); bqkv: (3,1,E) -> q, k, v each (B,S,E) f32."""
    B, S, E = x.shape
    assert S % block_s == 0
    grid = (B, S // block_s)
    seq_spec = pl.BlockSpec((1, block_s, E), lambda b, si: (b, si, 0))
    out = jax.ShapeDtypeStruct((B, S, E), jnp.float32)
    return pl.pallas_call(
        qkv_proj_kernel,
        out_shape=(out, out, out),
        grid=grid,
        in_specs=[
            seq_spec,
            # fused QKV weight / bias: constant index_map -> VMEM-resident
            pl.BlockSpec((3, E, E), lambda b, si: (0, 0, 0)),
            pl.BlockSpec((3, 1, E), lambda b, si: (0, 0, 0)),
        ],
        out_specs=(seq_spec, seq_spec, seq_spec),
        compiler_params=pltpu.CompilerParams(
            dimension_semantics=("parallel", "parallel")),
    )(x, wqkv, bqkv)


# --------- Kernel 2: causal per-channel (head_dim=1) flash attention --------
def attn_kernel(q_ref, k_ref, v_ref, wp_ref, bp_ref, o_ref,
                m_sc, l_sc, acc_sc):
    qi = pl.program_id(1)                 # query-block index
    ki = pl.program_id(2)                 # key-block index (reduction axis)

    tq = q_ref.shape[1]
    tk = k_ref.shape[1]
    E = wp_ref.shape[0]

    # ---- new query block: reset online-softmax state ------------------------
    @pl.when(ki == 0)
    def _init():
        m_sc[...] = jnp.full_like(m_sc, NEG_INF)
        l_sc[...] = jnp.zeros_like(l_sc)
        acc_sc[...] = jnp.zeros_like(acc_sc)

    def accumulate(s, v):
        # Online softmax over the key axis (axis=1); E stays in lanes.
        m_prev = m_sc[...]                                        # (tq, E)
        m_new = jnp.maximum(m_prev, jnp.max(s, axis=1))           # (tq, E)
        alpha = jnp.exp(m_prev - m_new)                           # (tq, E)
        p = jnp.exp(s - m_new[:, None, :])                        # (tq, tk, E)
        l_sc[...] = alpha * l_sc[...] + jnp.sum(p, axis=1)
        acc_sc[...] = alpha * acc_sc[...] + jnp.sum(p * v[None, :, :], axis=1)
        m_sc[...] = m_new

    # ---- key blocks strictly below the diagonal: no mask needed -------------
    @pl.when(ki < qi)
    def _full_block():
        s = q_ref[0][:, None, :] * k_ref[0][None, :, :]   # (tq, tk, E), scale==1
        accumulate(s, v_ref[0])

    # ---- diagonal block: causal mask, then finalize (last contributing blk) -
    @pl.when(ki == qi)
    def _diag_block():
        s = q_ref[0][:, None, :] * k_ref[0][None, :, :]
        # Square tiles on the diagonal -> block-relative indices suffice.
        row = jax.lax.broadcasted_iota(jnp.int32, (tq, tk, E), 0)
        col = jax.lax.broadcasted_iota(jnp.int32, (tq, tk, E), 1)
        s = jnp.where(col <= row, s, NEG_INF)
        accumulate(s, v_ref[0])

        # Deferred softmax normalization + fused output projection.
        attn = acc_sc[...] * pl.reciprocal(l_sc[...], approx=True)   # (tq, E)
        o_ref[0] = (jnp.dot(attn, wp_ref[...],
                            preferred_element_type=jnp.float32)
                    + bp_ref[...]).astype(o_ref.dtype)

    # key blocks with ki > qi are entirely above the diagonal: no compute, and
    # the lax.min-clamped index_map below means no DMA either.


def causal_channel_attention(q, k, v, wp, bp, *, block_q=8, block_k=8):
    B, S, E = q.shape
    assert S % block_q == 0 and S % block_k == 0
    assert block_q == block_k, "causal block skipping assumes square tiles"
    grid = (B, S // block_q, S // block_k)

    # Clamp the K/V block index to the diagonal: blocks above it are skipped,
    # and re-using the previous block index means Pallas issues no DMA.
    kv_map = lambda b, qi, ki: (b, lax.min(ki, qi), 0)

    return pl.pallas_call(
        attn_kernel,
        out_shape=jax.ShapeDtypeStruct((B, S, E), q.dtype),
        grid=grid,
        in_specs=[
            pl.BlockSpec((1, block_q, E), lambda b, qi, ki: (b, qi, 0)),
            pl.BlockSpec((1, block_k, E), kv_map),
            pl.BlockSpec((1, block_k, E), kv_map),
            # output projection weight / bias: VMEM-resident
            pl.BlockSpec((E, E), lambda b, qi, ki: (0, 0)),
            pl.BlockSpec((1, E), lambda b, qi, ki: (0, 0)),
        ],
        out_specs=pl.BlockSpec((1, block_q, E), lambda b, qi, ki: (b, qi, 0)),
        scratch_shapes=[
            pltpu.VMEM((block_q, E), jnp.float32),   # running max       m
            pltpu.VMEM((block_q, E), jnp.float32),   # running denom     l
            pltpu.VMEM((block_q, E), jnp.float32),   # running numerator acc
        ],
        compiler_params=pltpu.CompilerParams(
            dimension_semantics=("parallel", "parallel", "arbitrary")),
    )(q, k, v, wp, bp)


def multi_head_attention(x, wqkv, bqkv, wp, bp, *, block_q=8, block_k=8):
    """x: (B,S,E); wqkv: (3,E,E); bqkv: (3,1,E); wp: (E,E); bp: (1,E)."""
    q, k, v = qkv_projection(x, wqkv, bqkv, block_s=block_k)
    return causal_channel_attention(q, k, v, wp, bp,
                                    block_q=block_q, block_k=block_k)


# ------------------------------ parameter setup ------------------------------
def make_lora_linear(key, in_f, out_f, r):
    """Deterministic synthetic params; returns effective [in, out] weight + bias."""
    k1, k2, k3, k4 = jax.random.split(key, 4)
    w = jax.random.normal(k1, (out_f, in_f), jnp.float32) * 0.02   # frozen weight
    b = jax.random.normal(k2, (out_f,), jnp.float32) * 0.02
    lora_a = jax.random.normal(k3, (in_f, r), jnp.float32) * 0.02
    lora_b = jax.random.normal(k4, (r, out_f), jnp.float32) * 0.02
    scaling = 1.0                                                  # alpha defaults to r
    w_eff = w.T + (lora_a @ lora_b) * scaling                      # (in, out)
    return w_eff, b


def ref_forward(x, wqkv, bqkv, wp, bp):
    """Pure-JAX reference mirroring the PyTorch forward (for validation)."""
    B, S, E = x.shape
    q = x @ wqkv[0] + bqkv[0, 0]
    k = x @ wqkv[1] + bqkv[1, 0]
    v = x @ wqkv[2] + bqkv[2, 0]
    # _split_heads: (B,S,E) -> (B,H=E,S,1); scale = 1/sqrt(head_dim) = 1.
    scores = jnp.einsum('bie,bje->bije', q, k)
    mask = jnp.tril(jnp.ones((S, S), dtype=bool))[None, :, :, None]
    scores = jnp.where(mask, scores, -jnp.inf)
    p = jax.nn.softmax(scores, axis=2)
    o = jnp.einsum('bije,bje->bie', p, v)
    return o @ wp + bp[0]


if __name__ == "__main__":
    B, S, E, r = 2, 16, 32, 4
    block = 8          # 2x2 q/k blocks: exercises causal skip + online softmax

    root = jax.random.PRNGKey(0)
    kx, k_att, k_proj = jax.random.split(root, 3)

    x = jax.random.normal(kx, (B, S, E), jnp.float32)

    # c_att: Linear(E, 3E, r); fold LoRA, pack as (3, E, E) / (3, 1, E).
    w_att, b_att = make_lora_linear(k_att, E, 3 * E, r)            # (E, 3E), (3E,)
    wqkv = jnp.transpose(w_att.reshape(E, 3, E), (1, 0, 2))        # (3, E, E)
    bqkv = b_att.reshape(3, 1, E)                                  # (3, 1, E)

    # c_proj: Linear(E, E, r)
    wp, b_proj = make_lora_linear(k_proj, E, E, r)
    bp = b_proj.reshape(1, E)

    out = multi_head_attention(x, wqkv, bqkv, wp, bp,
                               block_q=block, block_k=block)
    out = jax.block_until_ready(out)

    ref = ref_forward(x, wqkv, bqkv, wp, bp)
    assert out.shape == (B, S, E)
    np.testing.assert_allclose(np.asarray(out), np.asarray(ref),
                               rtol=2e-3, atol=5e-4)
    print("KERNEL_OK")
</pallas_src>

<mosaic_0001>
module attributes {stable_mosaic.version = 11 : i64} {
  func.func @qkv_proj_kernel(%arg0: i32, %arg1: i32, %arg2: memref<1x8x32xf32, #tpu.memory_space<vmem>>, %arg3: memref<3x32x32xf32, #tpu.memory_space<vmem>>, %arg4: memref<3x1x32xf32, #tpu.memory_space<vmem>>, %arg5: memref<1x8x32xf32, #tpu.memory_space<vmem>>, %arg6: memref<1x8x32xf32, #tpu.memory_space<vmem>>, %arg7: memref<1x8x32xf32, #tpu.memory_space<vmem>>) attributes {dimension_semantics = [#tpu.dimension_semantics<parallel>, #tpu.dimension_semantics<parallel>], iteration_bounds = array<i64: 2, 2>, scalar_prefetch = 0 : i64, scratch_operands = 0 : i64, tpu.core_type = #tpu.core_type<tc>, window_params = [{transform_indices = @transform_0, window_bounds = array<i64: 1, 8, 32>}, {pipeline_mode = #tpu.pipeline_mode<synchronous>, transform_indices = @transform_1, window_bounds = array<i64: 3, 32, 32>}, {pipeline_mode = #tpu.pipeline_mode<synchronous>, transform_indices = @transform_2, window_bounds = array<i64: 3, 1, 32>}, {transform_indices = @transform_3, window_bounds = array<i64: 1, 8, 32>}, {transform_indices = @transform_4, window_bounds = array<i64: 1, 8, 32>}, {transform_indices = @transform_5, window_bounds = array<i64: 1, 8, 32>}]} {
    %c0 = arith.constant 0 : index
    %c0_0 = arith.constant 0 : index
    %c0_1 = arith.constant 0 : index
    %0 = vector.load %arg2[%c0, %c0_0, %c0_1] : memref<1x8x32xf32, #tpu.memory_space<vmem>>, vector<1x8x32xf32>
    %1 = vector.shape_cast %0 : vector<1x8x32xf32> to vector<8x32xf32>
    %c0_2 = arith.constant 0 : index
    %c0_3 = arith.constant 0 : index
    %c0_4 = arith.constant 0 : index
    %2 = vector.load %arg3[%c0_2, %c0_3, %c0_4] : memref<3x32x32xf32, #tpu.memory_space<vmem>>, vector<1x32x32xf32>
    %3 = vector.shape_cast %2 : vector<1x32x32xf32> to vector<32x32xf32>
    %cst = arith.constant dense<0.000000e+00> : vector<8x32xf32>
    %4 = tpu.matmul %1, %3, %cst {dimension_numbers = #tpu.dot_dimension_numbers<[1], [0], [0], [1], [0, 0, 1, 1], [], []>} : vector<8x32xf32>, vector<32x32xf32>, vector<8x32xf32> -> vector<8x32xf32>
    %c0_5 = arith.constant 0 : index
    %c0_6 = arith.constant 0 : index
    %c0_7 = arith.constant 0 : index
    %5 = vector.load %arg4[%c0_5, %c0_6, %c0_7] : memref<3x1x32xf32, #tpu.memory_space<vmem>>, vector<1x1x32xf32>
    %6 = vector.shape_cast %5 : vector<1x1x32xf32> to vector<1x32xf32>
    %7 = vector.broadcast %6 : vector<1x32xf32> to vector<8x32xf32>
    %8 = arith.addf %4, %7 : vector<8x32xf32>
    %c0_8 = arith.constant 0 : index
    %c0_9 = arith.constant 0 : index
    %c0_10 = arith.constant 0 : index
    %9 = vector.load %arg5[%c0_8, %c0_9, %c0_10] : memref<1x8x32xf32, #tpu.memory_space<vmem>>, vector<1x8x32xf32>
    %10 = vector.shape_cast %9 : vector<1x8x32xf32> to vector<8x32xf32>
    %11 = vector.shape_cast %8 : vector<8x32xf32> to vector<1x8x32xf32>
    tpu.vector_store %arg5[%c0_8, %c0_9, %c0_10], %11 {strides = array<i32>} : memref<1x8x32xf32, #tpu.memory_space<vmem>>, vector<1x8x32xf32>,
    %c1 = arith.constant 1 : index
    %c0_11 = arith.constant 0 : index
    %c0_12 = arith.constant 0 : index
    %12 = vector.load %arg3[%c1, %c0_11, %c0_12] : memref<3x32x32xf32, #tpu.memory_space<vmem>>, vector<1x32x32xf32>
    %13 = vector.shape_cast %12 : vector<1x32x32xf32> to vector<32x32xf32>
    %cst_13 = arith.constant dense<0.000000e+00> : vector<8x32xf32>
    %14 = tpu.matmul %1, %13, %cst_13 {dimension_numbers = #tpu.dot_dimension_numbers<[1], [0], [0], [1], [0, 0, 1, 1], [], []>} : vector<8x32xf32>, vector<32x32xf32>, vector<8x32xf32> -> vector<8x32xf32>
    %c1_14 = arith.constant 1 : index
    %c0_15 = arith.constant 0 : index
    %c0_16 = arith.constant 0 : index
    %15 = vector.load %arg4[%c1_14, %c0_15, %c0_16] : memref<3x1x32xf32, #tpu.memory_space<vmem>>, vector<1x1x32xf32>
    %16 = vector.shape_cast %15 : vector<1x1x32xf32> to vector<1x32xf32>
    %17 = vector.broadcast %16 : vector<1x32xf32> to vector<8x32xf32>
    %18 = arith.addf %14, %17 : vector<8x32xf32>
    %c0_17 = arith.constant 0 : index
    %c0_18 = arith.constant 0 : index
    %c0_19 = arith.constant 0 : index
    %19 = vector.load %arg6[%c0_17, %c0_18, %c0_19] : memref<1x8x32xf32, #tpu.memory_space<vmem>>, vector<1x8x32xf32>
    %20 = vector.shape_cast %19 : vector<1x8x32xf32> to vector<8x32xf32>
    %21 = vector.shape_cast %18 : vector<8x32xf32> to vector<1x8x32xf32>
    tpu.vector_store %arg6[%c0_17, %c0_18, %c0_19], %21 {strides = array<i32>} : memref<1x8x32xf32, #tpu.memory_space<vmem>>, vector<1x8x32xf32>,
    %c2 = arith.constant 2 : index
    %c0_20 = arith.constant 0 : index
    %c0_21 = arith.constant 0 : index
    %22 = vector.load %arg3[%c2, %c0_20, %c0_21] : memref<3x32x32xf32, #tpu.memory_space<vmem>>, vector<1x32x32xf32>
    %23 = vector.shape_cast %22 : vector<1x32x32xf32> to vector<32x32xf32>
    %cst_22 = arith.constant dense<0.000000e+00> : vector<8x32xf32>
    %24 = tpu.matmul %1, %23, %cst_22 {dimension_numbers = #tpu.dot_dimension_numbers<[1], [0], [0], [1], [0, 0, 1, 1], [], []>} : vector<8x32xf32>, vector<32x32xf32>, vector<8x32xf32> -> vector<8x32xf32>
    %c2_23 = arith.constant 2 : index
    %c0_24 = arith.constant 0 : index
    %c0_25 = arith.constant 0 : index
    %25 = vector.load %arg4[%c2_23, %c0_24, %c0_25] : memref<3x1x32xf32, #tpu.memory_space<vmem>>, vector<1x1x32xf32>
    %26 = vector.shape_cast %25 : vector<1x1x32xf32> to vector<1x32xf32>
    %27 = vector.broadcast %26 : vector<1x32xf32> to vector<8x32xf32>
    %28 = arith.addf %24, %27 : vector<8x32xf32>
    %c0_26 = arith.constant 0 : index
    %c0_27 = arith.constant 0 : index
    %c0_28 = arith.constant 0 : index
    %29 = vector.load %arg7[%c0_26, %c0_27, %c0_28] : memref<1x8x32xf32, #tpu.memory_space<vmem>>, vector<1x8x32xf32>
    %30 = vector.shape_cast %29 : vector<1x8x32xf32> to vector<8x32xf32>
    %31 = vector.shape_cast %28 : vector<8x32xf32> to vector<1x8x32xf32>
    tpu.vector_store %arg7[%c0_26, %c0_27, %c0_28], %31 {strides = array<i32>} : memref<1x8x32xf32, #tpu.memory_space<vmem>>, vector<1x8x32xf32>,
    return
  }
  func.func @transform_0(%arg0: i32, %arg1: i32) -> (i32, i32, i32) {
    %c0_i32 = arith.constant 0 : i32
    %c0_i32_0 = arith.constant 0 : i32
    return %arg0, %arg1, %c0_i32 : i32, i32, i32
  }
  func.func @transform_1(%arg0: i32, %arg1: i32) -> (i32, i32, i32) {
    %c0_i32 = arith.constant 0 : i32
    %c0_i32_0 = arith.constant 0 : i32
    %c0_i32_1 = arith.constant 0 : i32
    %c0_i32_2 = arith.constant 0 : i32
    return %c0_i32, %c0_i32_0, %c0_i32_1 : i32, i32, i32
  }
  func.func @transform_2(%arg0: i32, %arg1: i32) -> (i32, i32, i32) {
    %c0_i32 = arith.constant 0 : i32
    %c0_i32_0 = arith.constant 0 : i32
    %c0_i32_1 = arith.constant 0 : i32
    %c0_i32_2 = arith.constant 0 : i32
    return %c0_i32, %c0_i32_0, %c0_i32_1 : i32, i32, i32
  }
  func.func @transform_3(%arg0: i32, %arg1: i32) -> (i32, i32, i32) {
    %c0_i32 = arith.constant 0 : i32
    %c0_i32_0 = arith.constant 0 : i32
    return %arg0, %arg1, %c0_i32 : i32, i32, i32
  }
  func.func @transform_4(%arg0: i32, %arg1: i32) -> (i32, i32, i32) {
    %c0_i32 = arith.constant 0 : i32
    %c0_i32_0 = arith.constant 0 : i32
    return %arg0, %arg1, %c0_i32 : i32, i32, i32
  }
  func.func @transform_5(%arg0: i32, %arg1: i32) -> (i32, i32, i32) {
    %c0_i32 = arith.constant 0 : i32
    %c0_i32_0 = arith.constant 0 : i32
    return %arg0, %arg1, %c0_i32 : i32, i32, i32
  }
}

</mosaic_0001>

<llo_original>
// kernel: tpu_custom_call.1
$region0: #{tpu_custom_call.1}
  #allocation0 [shape = 'u32[]', space=smem, size = 0x4, offset = 0x4, fixed_abs, tag = 'smem constant byte address 0x4 - core index']
  #allocation1 [shape = 'u32[144,128]{1,0:T(1,128)}', space=vmem, size = 0x12000, scoped, tag = 'internal scratch']
  %s0 = inlined_call_operand.hbm [shape: f32[2,16,32], index: 0, kind: input, shape index: {}]
  %s1 = inlined_call_operand.hbm [shape: f32[3,32,32], index: 1, kind: input, shape index: {}]
  %s2 = inlined_call_operand.vmem [shape: f32[3,1,32], index: 2, kind: input, shape index: {}]
  %s3 = inlined_call_operand.hbm [shape: f32[2,16,32], index: 3, kind: output, shape index: {0}]
  %s4 = inlined_call_operand.hbm [shape: f32[2,16,32], index: 4, kind: output, shape index: {1}]
  %s5 = inlined_call_operand.hbm [shape: f32[2,16,32], index: 5, kind: output, shape index: {2}]
  %6 = xla_tuple %s3, %s4, %s5
  %s7 = sld [smem:[#allocation0]]
  $region69: #{tpu_custom_call.1} parent=0
    _
  %s9 = ssub.s32 1, %s7
  %s10 = scalar_select 0, %s9, %s7
  $region1: #{tpu_custom_call.1} parent=0
    #allocation2 [shape = 'u8[8192]{0}', space=vmem, size = 0x2000, scoped, tag = 'input window, operand 0']
    #allocation3 [shape = 's32[2]{0}', space=sflag, size = 0x8, scoped, tag = 'scoped memory for tpu_custom_call.1']
    #allocation4 [shape = 's32[2]{0}', space=sflag, size = 0x8, scoped, tag = 'scoped memory for tpu_custom_call.1']
    #allocation5 [shape = 'u8[49152]{0}', space=vmem, size = 0xc000, scoped, tag = 'input window, operand 1, single buffered']
    #allocation6 [shape = 's32[1]{0}', space=sflag, size = 0x4, scoped, tag = 'scoped memory for tpu_custom_call.1']
    #allocation7 [shape = 'u8[8192]{0}', space=vmem, size = 0x2000, scoped, tag = 'output window, operand 0']
    #allocation8 [shape = 'u8[8192]{0}', space=vmem, size = 0x2000, scoped, tag = 'output window, operand 1']
    #allocation9 [shape = 's32[2]{0}', space=sflag, size = 0x8, scoped, tag = 'scoped memory for tpu_custom_call.1']
    #allocation10 [shape = 'u8[8192]{0}', space=vmem, size = 0x2000, scoped, tag = 'output window, operand 2']
    %11 = vsyncpa [#allocation3], 0
    %s12 = scalar_lea.sflag [#allocation3], 1
    %13 = vsyncpa %s12, 0
    %14 = vsyncpa [#allocation6], 0
    %15 = vsyncpa [#allocation4], 0
    %s16 = scalar_lea.sflag [#allocation4], 1
    %17 = vsyncpa %s16, 0
    %18 = vsyncpa [#allocation9], 0
    %s19 = scalar_lea.sflag [#allocation9], 1
    %20 = vsyncpa %s19, 0
    loop: start=0, step=1, limit=6
    $region2: #{tpu_custom_call.1} parent=1 // loop_pre_header
      _
    $region3: #{tpu_custom_call.1} parent=1 // loop_header
      %s22 = sphi 0, %s26
      %p23 = scmp.ge.s32.totalorder %s22, 6
      %s29 = sphi 0, %s41
      %s30 = sphi 0, %s37
      %s31 = sphi 0, %s29
      %s32 = sphi 0, %s30
      %s33 = sphi 0, %s31
      %s34 = sphi 0, %s32
      %s46 = sphi 0, %s48
      %s49 = sphi 0, %s46
      %s50 = sphi 0, %s49
      %s66 = sphi 0, %s50
      %s70 = sphi 0, %s70
      %s72 = sphi 0, %s70
      %s73 = sphi 0, %s72
      %s87 = sphi 0, %s73
      %s91 = sphi 0, %s91
      %s93 = sphi 0, %s91
      %s94 = sphi 0, %s93
      %s108 = sphi 0, %s94
      %s116 = sphi 0, %s118
      %s119 = sphi 0, %s116
      %s120 = sphi 0, %s119
      %s136 = sphi 0, %s120
      %s144 = sphi 0, %s146
      %s147 = sphi 0, %s144
      %s148 = sphi 0, %s147
      %s164 = sphi 0, %s148
      %s172 = sphi 0, %s174
      %s175 = sphi 0, %s172
      %s176 = sphi 0, %s175
      %s192 = sphi 0, %s176
    $region4: #{tpu_custom_call.1} parent=1 // loop_header_branch
      %25 = sbr.rel (%p23) target = $region8
    $region5: #{tpu_custom_call.1} parent=1 // loop_body
      %s27 = ssub.s32 %s22, 1
      %s28 = ssub.s32 %s22, 2
      %s35 = sadd.s32 1, %s30
      %p36 = scmp.ge.s32.totalorder %s35, 2
      %s37 = scalar_select %p36, 0, %s35
      %s38 = sadd.s32 1, %s29
      %s39 = scalar_select %p36, %s38, %s29
      %p40 = scmp.ge.s32.totalorder %s39, 2
      %s41 = scalar_select %p40, 0, %s39
      %s42 = ssub.s32 %s29, %s41
      %s43 = ssub.s32 %s30, %s37
      %s44 = sor.u32 %s42, %s43
      %p45 = scmp.eq.s32.totalorder %s44, 0
      %s47 = sadd.s32 %s46, 1
      %s48 = scalar_select %p45, %s46, %s47
      %p51 = pneg %p45
      %p52 = scmp.eq.s32.totalorder %s22, 3
      %p53 = por %p51, %p52
      %p54 = scmp.ne.s32.totalorder %s46, %s49
      %p55 = scmp.eq.s32.totalorder %s22, 0
      %p56 = por %p54, %p55
      %p57 = scmp.ne.s32.totalorder %s46, %s49
      %p58 = scmp.eq.s32.totalorder %s27, 3
      %p59 = por %p57, %p58
      %p60 = scmp.ne.s32.totalorder %s49, %s50
      %p61 = scmp.eq.s32.totalorder %s27, 0
      %p62 = por %p60, %p61
      %p63 = scmp.ne.s32.totalorder %s49, %s50
      %p64 = scmp.eq.s32.totalorder %s28, 3
      %p65 = por %p63, %p64
      %p67 = scmp.ne.s32.totalorder %s50, %s66
      %p68 = scmp.eq.s32.totalorder %s28, 0
      %p69 = por %p67, %p68
      %s71 = sadd.s32 %s70, 1
      %p74 = scmp.eq.s32.totalorder %s22, 3
      %p75 = scmp.ne.s32.totalorder %s70, %s72
      %p76 = scmp.eq.s32.totalorder %s22, 0
      %p77 = por %p75, %p76
      %p78 = scmp.ne.s32.totalorder %s70, %s72
      %p79 = scmp.eq.s32.totalorder %s27, 3
      %p80 = por %p78, %p79
      %p81 = scmp.ne.s32.totalorder %s72, %s73
      %p82 = scmp.eq.s32.totalorder %s27, 0
      %p83 = por %p81, %p82
      %p84 = scmp.ne.s32.totalorder %s72, %s73
      %p85 = scmp.eq.s32.totalorder %s28, 3
      %p86 = por %p84, %p85
      %p88 = scmp.ne.s32.totalorder %s73, %s87
      %p89 = scmp.eq.s32.totalorder %s28, 0
      %p90 = por %p88, %p89
      %s92 = sadd.s32 %s91, 1
      %p95 = scmp.eq.s32.totalorder %s22, 3
      %p96 = scmp.ne.s32.totalorder %s91, %s93
      %p97 = scmp.eq.s32.totalorder %s22, 0
      %p98 = por %p96, %p97
      %p99 = scmp.ne.s32.totalorder %s91, %s93
      %p100 = scmp.eq.s32.totalorder %s27, 3
      %p101 = por %p99, %p100
      %p102 = scmp.ne.s32.totalorder %s93, %s94
      %p103 = scmp.eq.s32.totalorder %s27, 0
      %p104 = por %p102, %p103
      %p105 = scmp.ne.s32.totalorder %s93, %s94
      %p106 = scmp.eq.s32.totalorder %s28, 3
      %p107 = por %p105, %p106
      %p109 = scmp.ne.s32.totalorder %s94, %s108
      %p110 = scmp.eq.s32.totalorder %s28, 0
      %p111 = por %p109, %p110
      %s112 = ssub.s32 %s29, %s41
      %s113 = ssub.s32 %s30, %s37
      %s114 = sor.u32 %s112, %s113
      %p115 = scmp.eq.s32.totalorder %s114, 0
      %s117 = sadd.s32 %s116, 1
      %s118 = scalar_select %p115, %s116, %s117
      %p121 = pneg %p115
      %p122 = scmp.eq.s32.totalorder %s22, 3
      %p123 = por %p121, %p122
      %p124 = scmp.ne.s32.totalorder %s116, %s119
      %p125 = scmp.eq.s32.totalorder %s22, 0
      %p126 = por %p124, %p125
      %p127 = scmp.ne.s32.totalorder %s116, %s119
      %p128 = scmp.eq.s32.totalorder %s27, 3
      %p129 = por %p127, %p128
      %p130 = scmp.ne.s32.totalorder %s119, %s120
      %p131 = scmp.eq.s32.totalorder %s27, 0
      %p132 = por %p130, %p131
      %p133 = scmp.ne.s32.totalorder %s119, %s120
      %p134 = scmp.eq.s32.totalorder %s28, 3
      %p135 = por %p133, %p134
      %p137 = scmp.ne.s32.totalorder %s120, %s136
      %p138 = scmp.eq.s32.totalorder %s28, 0
      %p139 = por %p137, %p138
      %s140 = ssub.s32 %s29, %s41
      %s141 = ssub.s32 %s30, %s37
      %s142 = sor.u32 %s140, %s141
      %p143 = scmp.eq.s32.totalorder %s142, 0
      %s145 = sadd.s32 %s144, 1
      %s146 = scalar_select %p143, %s144, %s145
      %p149 = pneg %p143
      %p150 = scmp.eq.s32.totalorder %s22, 3
      %p151 = por %p149, %p150
      %p152 = scmp.ne.s32.totalorder %s144, %s147
      %p153 = scmp.eq.s32.totalorder %s22, 0
      %p154 = por %p152, %p153
      %p155 = scmp.ne.s32.totalorder %s144, %s147
      %p156 = scmp.eq.s32.totalorder %s27, 3
      %p157 = por %p155, %p156
      %p158 = scmp.ne.s32.totalorder %s147, %s148
      %p159 = scmp.eq.s32.totalorder %s27, 0
      %p160 = por %p158, %p159
      %p161 = scmp.ne.s32.totalorder %s147, %s148
      %p162 = scmp.eq.s32.totalorder %s28, 3
      %p163 = por %p161, %p162
      %p165 = scmp.ne.s32.totalorder %s148, %s164
      %p166 = scmp.eq.s32.totalorder %s28, 0
      %p167 = por %p165, %p166
      %s168 = ssub.s32 %s29, %s41
      %s169 = ssub.s32 %s30, %s37
      %s170 = sor.u32 %s168, %s169
      %p171 = scmp.eq.s32.totalorder %s170, 0
      %s173 = sadd.s32 %s172, 1
      %s174 = scalar_select %p171, %s172, %s173
      %p177 = pneg %p171
      %p178 = scmp.eq.s32.totalorder %s22, 3
      %p179 = por %p177, %p178
      %p180 = scmp.ne.s32.totalorder %s172, %s175
      %p181 = scmp.eq.s32.totalorder %s22, 0
      %p182 = por %p180, %p181
      %p183 = scmp.ne.s32.totalorder %s172, %s175
      %p184 = scmp.eq.s32.totalorder %s27, 3
      %p185 = por %p183, %p184
      %p186 = scmp.ne.s32.totalorder %s175, %s176
      %p187 = scmp.eq.s32.totalorder %s27, 0
      %p188 = por %p186, %p187
      %p189 = scmp.ne.s32.totalorder %s175, %s176
      %p190 = scmp.eq.s32.totalorder %s28, 3
      %p191 = por %p189, %p190
      %p193 = scmp.ne.s32.totalorder %s176, %s192
      %p194 = scmp.eq.s32.totalorder %s28, 0
      %p195 = por %p193, %p194
      %p196 = scmp.le.s32.totalorder 1, %s22
      %p197 = scmp.lt.s32.totalorder %s22, 5
      %p198 = pnand %p196, %p197
      %p199 = pneg %p198
      // Predicated region
      $region9: #{tpu_custom_call.1} parent=5 // pred_check
        _
      $region10: #{tpu_custom_call.1} parent=5 // pred_check_branch
        %201 = sbr.rel (%p198) target = $region12
      $region11: #{tpu_custom_call.1} parent=5 // pred_region
        %s202 = ssub.s32 %s22, 1
        // Predicated region
        $region13: #{tpu_custom_call.1} parent=11 // pred_check
          %p203 = pneg %p83
        $region14: #{tpu_custom_call.1} parent=11 // pred_check_branch
          %205 = sbr.rel (%p203) target = $region16
        $region15: #{tpu_custom_call.1} parent=11 // pred_region
          %s207 = ssub.s32 1536, 1536
          %208 = vsyncadd [#allocation6], %s207
          %s209 = sshll.u32 [#allocation5], 4
          %s210 = int_to_ptr.vmem [resolvable:$true] %s209
          %215 = dma.hbm_to_vmem [thread:$0]  %s1, 1536, %s210, [#allocation6], 128, 128, 8
        $region16: #{tpu_custom_call.1} parent=11 // pred_fallthru
          _
        // Predicated region
        $region17: #{tpu_custom_call.1} parent=11 // pred_check
          %p216 = pneg %p104
        $region18: #{tpu_custom_call.1} parent=11 // pred_check_branch
          %218 = sbr.rel (%p216) target = $region20
        $region19: #{tpu_custom_call.1} parent=11 // pred_region
          _
        $region20: #{tpu_custom_call.1} parent=11 // pred_fallthru
          _
      $region12: #{tpu_custom_call.1} parent=5 // pred_fallthru
        _
      %p219 = scmp.lt.s32.totalorder %s22, 4
      // Predicated region
      $region21: #{tpu_custom_call.1} parent=5 // pred_check
        %p220 = pneg %p219
      $region22: #{tpu_custom_call.1} parent=5 // pred_check_branch
        %222 = sbr.rel (%p220) target = $region24
      $region23: #{tpu_custom_call.1} parent=5 // pred_region
        // Predicated region
        $region25: #{tpu_custom_call.1} parent=23 // pred_check
          %p223 = pneg %p56
        $region26: #{tpu_custom_call.1} parent=23 // pred_check_branch
          %225 = sbr.rel (%p223) target = $region28
        $region27: #{tpu_custom_call.1} parent=23 // pred_region
          %s226 = sand.u32 %s46, 1
          %s227 = scalar_lea.sflag [#allocation3], %s226
          %s228 = sand.u32 %s46, 1
          %s229 = smul.addr %s228, 8
          %s230 = scalar_lea.vmem [#allocation2], %s229
          %s232 = ssub.s32 128, 128
          %233 = vsyncadd %s227, %s232
          %s234 = smul.addr %s29, 2
          %s235 = sadd.s32 %s30, %s234
          %s236 = smul.addr %s235, 128
          %s237 = scalar_lea.hbm %s0, %s236
          %s239 = sshll.u32 %s230, 4
          %s240 = int_to_ptr.vmem [resolvable:$true] %s239
          %242 = dma.hbm_to_vmem [thread:$0]  %s237, 128, %s240, %s227
        $region28: #{tpu_custom_call.1} parent=23 // pred_fallthru
          _
      $region24: #{tpu_custom_call.1} parent=5 // pred_fallthru
        _
      %p243 = scmp.le.s32.totalorder 1, %s22
      %p244 = scmp.lt.s32.totalorder %s22, 5
      %p245 = pnand %p243, %p244
      %p246 = pneg %p245
      // Predicated region
      $region29: #{tpu_custom_call.1} parent=5 // pred_check
        _
      $region30: #{tpu_custom_call.1} parent=5 // pred_check_branch
        %248 = sbr.rel (%p245) target = $region32
      $region31: #{tpu_custom_call.1} parent=5 // pred_region
        %s249 = ssub.s32 %s22, 1
        %s250 = sand.u32 %s49, 1
        %s251 = scalar_lea.sflag [#allocation3], %s250
        %s252 = sand.u32 %s49, 1
        %s253 = smul.addr %s252, 8
        %s254 = scalar_lea.vmem [#allocation2], %s253
        // Predicated region
        $region33: #{tpu_custom_call.1} parent=31 // pred_check
          %p255 = pneg %p62
        $region34: #{tpu_custom_call.1} parent=31 // pred_check_branch
          %257 = sbr.rel (%p255) target = $region36
        $region35: #{tpu_custom_call.1} parent=31 // pred_region
          %258 = dma.done %s251, 128
        $region36: #{tpu_custom_call.1} parent=31 // pred_fallthru
          _
        // Predicated region
        $region37: #{tpu_custom_call.1} parent=31 // pred_check
          %p259 = pneg %p83
        $region38: #{tpu_custom_call.1} parent=31 // pred_check_branch
          %261 = sbr.rel (%p259) target = $region40
        $region39: #{tpu_custom_call.1} parent=31 // pred_region
          %262 = dma.done [#allocation6], 1536
        $region40: #{tpu_custom_call.1} parent=31 // pred_fallthru
          _
        %s263 = sand.u32 %s49, 1
        %s264 = scalar_lea.sflag [#allocation3], %s263
        %s265 = sand.u32 %s49, 1
        %s266 = smul.addr %s265, 8
        %s267 = scalar_lea.vmem [#allocation2], %s266
        %p268 = pneg %p62
        %p269 = pneg %p59
        %p270 = pneg %p83
        %p271 = pneg %p80
        %p272 = pneg %p104
        %p273 = pneg %p101
        %p274 = pneg %p132
        %p275 = pneg %p129
        %s276 = sand.u32 %s119, 1
        %s277 = scalar_lea.sflag [#allocation4], %s276
        %s278 = sand.u32 %s119, 1
        %s279 = smul.addr %s278, 8
        %s280 = scalar_lea.vmem [#allocation7], %s279
        %p281 = pneg %p160
        %p282 = pneg %p157
        %s283 = sand.u32 %s27, 1
        %s284 = scalar_lea.sflag [#allocation9], %s283
        %s285 = sand.u32 %s147, 1
        %s286 = smul.addr %s285, 8
        %s287 = scalar_lea.vmem [#allocation8], %s286
        %p288 = pneg %p188
        %p289 = pneg %p185
        %s290 = sand.u32 %s27, 1
        %s291 = scalar_lea.sflag [#allocation9], %s290
        %s292 = sand.u32 %s175, 1
        %s293 = smul.addr %s292, 8
        %s294 = scalar_lea.vmem [#allocation10], %s293
        %v295 = vld [vmem:[%s254] sm:$0xff]
        %v296 = vld [vmem:[#allocation5] sm:$0xff]
        %v297 = vld [vmem:[#allocation5 + $0x8] sm:$0xff]
        %v298 = vld [vmem:[#allocation5 + $0x10] sm:$0xff]
        %v299 = vld [vmem:[#allocation5 + $0x18] sm:$0xff]
        %v300 = vld [vmem:[%s2] sm:$0x1]
        %v302 = vlaneseq
        %v303 = vshrl.u32 %v302, 7
        %v304 = vsub.s32 0, %v303
        %v305 = vrot.slane %v300, %v304
        %vm307 = vcmask 261120
        %v309 = vsel %vm307, %v295, 0
        %311 = vmatprep.subr.mxu0 0.0
        %312 = vmatpush1.msra.mxu0 %v296
        %313 = vmatprep.subr.mxu0 0.0
        %314 = vmatpush1.msra.mxu0 %v297
        %315 = vmatprep.subr.mxu0 0.0
        %316 = vmatpush1.msra.mxu0 %v298
        %317 = vmatprep.subr.mxu0 0.0
        %318 = vmatpush1.msra.mxu0 %v299
        %319 = vmatprep.subr.mxu0 0.0
        %320 = vmatpush1.msra.mxu0 0.0
        %321 = vmatprep.subr.mxu0 0.0
        %322 = vmatpush1.msra.mxu0 0.0
        %323 = vmatprep.subr.mxu0 0.0
        %324 = vmatpush1.msra.mxu0 0.0
        %325 = vmatprep.subr.mxu0 0.0
        %326 = vmatpush1.msra.mxu0 0.0
        %327 = vmatprep.subr.mxu0 0.0
        %328 = vmatpush1.msra.mxu0 0.0
        %329 = vmatprep.subr.mxu0 0.0
        %330 = vmatpush1.msra.mxu0 0.0
        %331 = vmatprep.subr.mxu0 0.0
        %332 = vmatpush1.msra.mxu0 0.0
        %333 = vmatprep.subr.mxu0 0.0
        %334 = vmatpush1.msra.mxu0 0.0
        %335 = vmatprep.subr.mxu0 0.0
        %336 = vmatpush1.msra.mxu0 0.0
        %337 = vmatprep.subr.mxu0 0.0
        %338 = vmatpush1.msra.mxu0 0.0
        %339 = vmatprep.subr.mxu0 0.0
        %340 = vmatpush1.msra.mxu0 0.0
        %341 = vmatprep.subr.mxu0 0.0
        %342 = vmatpush1.msra.mxu0 0.0
        %343 = vmatprep.subr.mxu0 0.0
        %344 = vmatpush1.msra.mxu0 0.0
        %345 = vmatprep.subr.mxu0 0.0
        %346 = vmatpush1.msra.mxu0 0.0
        %347 = vmatprep.subr.mxu0 0.0
        %348 = vmatpush1.msra.mxu0 0.0
        %349 = vmatprep.subr.mxu0 0.0
        %350 = vmatpush1.msra.mxu0 0.0
        %351 = vmatprep.subr.mxu0 0.0
        %352 = vmatpush1.msra.mxu0 0.0
        %353 = vmatprep.subr.mxu0 0.0
        %354 = vmatpush1.msra.mxu0 0.0
        %355 = vmatprep.subr.mxu0 0.0
        %356 = vmatpush1.msra.mxu0 0.0
        %357 = vmatprep.subr.mxu0 0.0
        %358 = vmatpush1.msra.mxu0 0.0
        %359 = vmatprep.subr.mxu0 0.0
        %360 = vmatpush1.msra.mxu0 0.0
        %361 = vmatprep.subr.mxu0 0.0
        %362 = vmatpush1.msra.mxu0 0.0
        %363 = vmatprep.subr.mxu0 0.0
        %364 = vmatpush1.msra.mxu0 0.0
        %365 = vmatprep.subr.mxu0 0.0
        %366 = vmatpush1.msra.mxu0 0.0
        %367 = vmatprep.subr.mxu0 0.0
        %368 = vmatpush1.msra.mxu0 0.0
        %369 = vmatprep.subr.mxu0 0.0
        %370 = vmatpush1.msra.mxu0 0.0
        %371 = vmatprep.subr.mxu0 0.0
        %372 = vmatpush1.msra.mxu0 0.0
        %373 = vmatprep.subr.mxu0 0.0
        %374 = vmatpush1.msra.mxu0 0.0
        %375 = vmatprep.mubr.f32.mxu0 0.0
        %376 = vmatmul.mubr.f32.gmra.mrb[0].mxu0 %v309
        %v377 = vpop.f32.mrb[0].mxu0
        %v378 = vadd.f32 %v305, %v377
        %v379 = vpop.f32.mrb[0].mxu0
        %380 = vdwg.mxu0
        %381 = vst.msk [vmem:[%s280] sm:$0xff] %vm307, %v378
        %s382 = scalar_lea.vmem [#allocation5], 32
        %v383 = vld [vmem:[%s382] sm:$0xff]
        %v384 = vld [vmem:[%s382 + $0x8] sm:$0xff]
        %v385 = vld [vmem:[%s382 + $0x10] sm:$0xff]
        %v386 = vld [vmem:[%s382 + $0x18] sm:$0xff]
        %s387 = scalar_lea.vmem %s2, 1
        %v388 = vld [vmem:[%s387] sm:$0x1]
        %v390 = vlaneseq
        %v391 = vshrl.u32 %v390, 7
        %v392 = vsub.s32 0, %v391
        %v393 = vrot.slane %v388, %v392
        %395 = vmatprep.subr.mxu0 0.0
        %396 = vmatpush1.msra.mxu0 %v383
        %397 = vmatprep.subr.mxu0 0.0
        %398 = vmatpush1.msra.mxu0 %v384
        %399 = vmatprep.subr.mxu0 0.0
        %400 = vmatpush1.msra.mxu0 %v385
        %401 = vmatprep.subr.mxu0 0.0
        %402 = vmatpush1.msra.mxu0 %v386
        %403 = vmatprep.subr.mxu0 0.0
        %404 = vmatpush1.msra.mxu0 0.0
        %405 = vmatprep.subr.mxu0 0.0
        %406 = vmatpush1.msra.mxu0 0.0
        %407 = vmatprep.subr.mxu0 0.0
        %408 = vmatpush1.msra.mxu0 0.0
        %409 = vmatprep.subr.mxu0 0.0
        %410 = vmatpush1.msra.mxu0 0.0
        %411 = vmatprep.subr.mxu0 0.0
        %412 = vmatpush1.msra.mxu0 0.0
        %413 = vmatprep.subr.mxu0 0.0
        %414 = vmatpush1.msra.mxu0 0.0
        %415 = vmatprep.subr.mxu0 0.0
        %416 = vmatpush1.msra.mxu0 0.0
        %417 = vmatprep.subr.mxu0 0.0
        %418 = vmatpush1.msra.mxu0 0.0
        %419 = vmatprep.subr.mxu0 0.0
        %420 = vmatpush1.msra.mxu0 0.0
        %421 = vmatprep.subr.mxu0 0.0
        %422 = vmatpush1.msra.mxu0 0.0
        %423 = vmatprep.subr.mxu0 0.0
        %424 = vmatpush1.msra.mxu0 0.0
        %425 = vmatprep.subr.mxu0 0.0
        %426 = vmatpush1.msra.mxu0 0.0
        %427 = vmatprep.subr.mxu0 0.0
        %428 = vmatpush1.msra.mxu0 0.0
        %429 = vmatprep.subr.mxu0 0.0
        %430 = vmatpush1.msra.mxu0 0.0
        %431 = vmatprep.subr.mxu0 0.0
        %432 = vmatpush1.msra.mxu0 0.0
        %433 = vmatprep.subr.mxu0 0.0
        %434 = vmatpush1.msra.mxu0 0.0
        %435 = vmatprep.subr.mxu0 0.0
        %436 = vmatpush1.msra.mxu0 0.0
        %437 = vmatprep.subr.mxu0 0.0
        %438 = vmatpush1.msra.mxu0 0.0
        %439 = vmatprep.subr.mxu0 0.0
        %440 = vmatpush1.msra.mxu0 0.0
        %441 = vmatprep.subr.mxu0 0.0
        %442 = vmatpush1.msra.mxu0 0.0
        %443 = vmatprep.subr.mxu0 0.0
        %444 = vmatpush1.msra.mxu0 0.0
        %445 = vmatprep.subr.mxu0 0.0
        %446 = vmatpush1.msra.mxu0 0.0
        %447 = vmatprep.subr.mxu0 0.0
        %448 = vmatpush1.msra.mxu0 0.0
        %449 = vmatprep.subr.mxu0 0.0
        %450 = vmatpush1.msra.mxu0 0.0
        %451 = vmatprep.subr.mxu0 0.0
        %452 = vmatpush1.msra.mxu0 0.0
        %453 = vmatprep.subr.mxu0 0.0
        %454 = vmatpush1.msra.mxu0 0.0
        %455 = vmatprep.subr.mxu0 0.0
        %456 = vmatpush1.msra.mxu0 0.0
        %457 = vmatprep.subr.mxu0 0.0
        %458 = vmatpush1.msra.mxu0 0.0
        %459 = vmatprep.mubr.f32.mxu0 0.0
        %460 = vmatmul.mubr.f32.gmra.mrb[0].mxu0 %v309
        %v461 = vpop.f32.mrb[0].mxu0
        %v462 = vadd.f32 %v393, %v461
        %v463 = vpop.f32.mrb[0].mxu0
        %464 = vdwg.mxu0
        %465 = vst.msk [vmem:[%s287] sm:$0xff] %vm307, %v462
        %s466 = scalar_lea.vmem [#allocation5], 64
        %v467 = vld [vmem:[%s466] sm:$0xff]
        %v468 = vld [vmem:[%s466 + $0x8] sm:$0xff]
        %v469 = vld [vmem:[%s466 + $0x10] sm:$0xff]
        %v470 = vld [vmem:[%s466 + $0x18] sm:$0xff]
        %s471 = scalar_lea.vmem %s2, 2
        %v472 = vld [vmem:[%s471] sm:$0x1]
        %v474 = vlaneseq
        %v475 = vshrl.u32 %v474, 7
        %v476 = vsub.s32 0, %v475
        %v477 = vrot.slane %v472, %v476
        %479 = vmatprep.subr.mxu0 0.0
        %480 = vmatpush1.msra.mxu0 %v467
        %481 = vmatprep.subr.mxu0 0.0
        %482 = vmatpush1.msra.mxu0 %v468
        %483 = vmatprep.subr.mxu0 0.0
        %484 = vmatpush1.msra.mxu0 %v469
        %485 = vmatprep.subr.mxu0 0.0
        %486 = vmatpush1.msra.mxu0 %v470
        %487 = vmatprep.subr.mxu0 0.0
        %488 = vmatpush1.msra.mxu0 0.0
        %489 = vmatprep.subr.mxu0 0.0
        %490 = vmatpush1.msra.mxu0 0.0
        %491 = vmatprep.subr.mxu0 0.0
        %492 = vmatpush1.msra.mxu0 0.0
        %493 = vmatprep.subr.mxu0 0.0
        %494 = vmatpush1.msra.mxu0 0.0
        %495 = vmatprep.subr.mxu0 0.0
        %496 = vmatpush1.msra.mxu0 0.0
        %497 = vmatprep.subr.mxu0 0.0
        %498 = vmatpush1.msra.mxu0 0.0
        %499 = vmatprep.subr.mxu0 0.0
        %500 = vmatpush1.msra.mxu0 0.0
        %501 = vmatprep.subr.mxu0 0.0
        %502 = vmatpush1.msra.mxu0 0.0
        %503 = vmatprep.subr.mxu0 0.0
        %504 = vmatpush1.msra.mxu0 0.0
        %505 = vmatprep.subr.mxu0 0.0
        %506 = vmatpush1.msra.mxu0 0.0
        %507 = vmatprep.subr.mxu0 0.0
        %508 = vmatpush1.msra.mxu0 0.0
        %509 = vmatprep.subr.mxu0 0.0
        %510 = vmatpush1.msra.mxu0 0.0
        %511 = vmatprep.subr.mxu0 0.0
        %512 = vmatpush1.msra.mxu0 0.0
        %513 = vmatprep.subr.mxu0 0.0
        %514 = vmatpush1.msra.mxu0 0.0
        %515 = vmatprep.subr.mxu0 0.0
        %516 = vmatpush1.msra.mxu0 0.0
        %517 = vmatprep.subr.mxu0 0.0
        %518 = vmatpush1.msra.mxu0 0.0
        %519 = vmatprep.subr.mxu0 0.0
        %520 = vmatpush1.msra.mxu0 0.0
        %521 = vmatprep.subr.mxu0 0.0
        %522 = vmatpush1.msra.mxu0 0.0
        %523 = vmatprep.subr.mxu0 0.0
        %524 = vmatpush1.msra.mxu0 0.0
        %525 = vmatprep.subr.mxu0 0.0
        %526 = vmatpush1.msra.mxu0 0.0
        %527 = vmatprep.subr.mxu0 0.0
        %528 = vmatpush1.msra.mxu0 0.0
        %529 = vmatprep.subr.mxu0 0.0
        %530 = vmatpush1.msra.mxu0 0.0
        %531 = vmatprep.subr.mxu0 0.0
        %532 = vmatpush1.msra.mxu0 0.0
        %533 = vmatprep.subr.mxu0 0.0
        %534 = vmatpush1.msra.mxu0 0.0
        %535 = vmatprep.subr.mxu0 0.0
        %536 = vmatpush1.msra.mxu0 0.0
        %537 = vmatprep.subr.mxu0 0.0
        %538 = vmatpush1.msra.mxu0 0.0
        %539 = vmatprep.subr.mxu0 0.0
        %540 = vmatpush1.msra.mxu0 0.0
        %541 = vmatprep.subr.mxu0 0.0
        %542 = vmatpush1.msra.mxu0 0.0
        %543 = vmatprep.mubr.f32.mxu0 0.0
        %544 = vmatmul.mubr.f32.gmra.mrb[0].mxu0 %v309
        %v545 = vpop.f32.mrb[0].mxu0
        %v546 = vadd.f32 %v477, %v545
        %v547 = vpop.f32.mrb[0].mxu0
        %548 = vdwg.mxu0
        %549 = vst.msk [vmem:[%s294] sm:$0xff] %vm307, %v546
        %s550 = sand.u32 %s119, 1
        %s551 = scalar_lea.sflag [#allocation4], %s550
        %s552 = sand.u32 %s119, 1
        %s553 = smul.addr %s552, 8
        %s554 = scalar_lea.vmem [#allocation7], %s553
        %s555 = sand.u32 %s27, 1
        %s556 = scalar_lea.sflag [#allocation9], %s555
        %s557 = sand.u32 %s147, 1
        %s558 = smul.addr %s557, 8
        %s559 = scalar_lea.vmem [#allocation8], %s558
        %s560 = sand.u32 %s27, 1
        %s561 = scalar_lea.sflag [#allocation9], %s560
        %s562 = sand.u32 %s175, 1
        %s563 = smul.addr %s562, 8
        %s564 = scalar_lea.vmem [#allocation10], %s563
        // Predicated region
        $region41: #{tpu_custom_call.1} parent=31 // pred_check
          %p565 = pneg %p129
        $region42: #{tpu_custom_call.1} parent=31 // pred_check_branch
          %567 = sbr.rel (%p565) target = $region44
        $region43: #{tpu_custom_call.1} parent=31 // pred_region
          %s569 = ssub.s32 128, 128
          %570 = vsyncadd %s551, %s569
          %s571 = smul.addr %s31, 2
          %s572 = sadd.s32 %s32, %s571
          %s573 = smul.addr %s572, 128
          %s574 = scalar_lea.hbm %s3, %s573
          %s576 = sshll.u32 %s554, 4
          %s577 = int_to_ptr.vmem [resolvable:$true] %s576
          %579 = dma.vmem_to_hbm [thread:$0]  %s577, 128, %s574, %s551
        $region44: #{tpu_custom_call.1} parent=31 // pred_fallthru
          _
        // Predicated region
        $region45: #{tpu_custom_call.1} parent=31 // pred_check
          %p580 = pneg %p157
        $region46: #{tpu_custom_call.1} parent=31 // pred_check_branch
          %582 = sbr.rel (%p580) target = $region48
        $region47: #{tpu_custom_call.1} parent=31 // pred_region
          %s584 = ssub.s32 128, 128
          %585 = vsyncadd %s556, %s584
          %s586 = smul.addr %s31, 2
          %s587 = sadd.s32 %s32, %s586
          %s588 = smul.addr %s587, 128
          %s589 = scalar_lea.hbm %s4, %s588
          %s591 = sshll.u32 %s559, 4
          %s592 = int_to_ptr.vmem [resolvable:$true] %s591
          %594 = dma.vmem_to_hbm [thread:$0]  %s592, 128, %s589, %s556
        $region48: #{tpu_custom_call.1} parent=31 // pred_fallthru
          _
        // Predicated region
        $region49: #{tpu_custom_call.1} parent=31 // pred_check
          %p595 = pneg %p185
        $region50: #{tpu_custom_call.1} parent=31 // pred_check_branch
          %597 = sbr.rel (%p595) target = $region52
        $region51: #{tpu_custom_call.1} parent=31 // pred_region
          %s599 = ssub.s32 128, 128
          %600 = vsyncadd %s561, %s599
          %s601 = smul.addr %s31, 2
          %s602 = sadd.s32 %s32, %s601
          %s603 = smul.addr %s602, 128
          %s604 = scalar_lea.hbm %s5, %s603
          %s606 = sshll.u32 %s564, 4
          %s607 = int_to_ptr.vmem [resolvable:$true] %s606
          %609 = dma.vmem_to_hbm [thread:$0]  %s607, 128, %s604, %s561
        $region52: #{tpu_custom_call.1} parent=31 // pred_fallthru
          _
      $region32: #{tpu_custom_call.1} parent=5 // pred_fallthru
        _
      %p610 = scmp.le.s32.totalorder 2, %s22
      // Predicated region
      $region53: #{tpu_custom_call.1} parent=5 // pred_check
        %p611 = pneg %p610
      $region54: #{tpu_custom_call.1} parent=5 // pred_check_branch
        %613 = sbr.rel (%p611) target = $region56
      $region55: #{tpu_custom_call.1} parent=5 // pred_region
        %s614 = ssub.s32 %s22, 2
        // Predicated region
        $region57: #{tpu_custom_call.1} parent=55 // pred_check
          %p615 = pneg %p135
        $region58: #{tpu_custom_call.1} parent=55 // pred_check_branch
          %617 = sbr.rel (%p615) target = $region60
        $region59: #{tpu_custom_call.1} parent=55 // pred_region
          %s618 = sand.u32 %s120, 1
          %s619 = scalar_lea.sflag [#allocation4], %s618
          %s620 = sand.u32 %s120, 1
          %s621 = smul.addr %s620, 8
          %s622 = scalar_lea.vmem [#allocation7], %s621
          %623 = dma.done %s619, 128
        $region60: #{tpu_custom_call.1} parent=55 // pred_fallthru
          _
        // Predicated region
        $region61: #{tpu_custom_call.1} parent=55 // pred_check
          %p624 = pneg %p163
        $region62: #{tpu_custom_call.1} parent=55 // pred_check_branch
          %626 = sbr.rel (%p624) target = $region64
        $region63: #{tpu_custom_call.1} parent=55 // pred_region
          %s627 = sand.u32 %s28, 1
          %s628 = scalar_lea.sflag [#allocation9], %s627
          %s629 = sand.u32 %s148, 1
          %s630 = smul.addr %s629, 8
          %s631 = scalar_lea.vmem [#allocation8], %s630
          %632 = dma.done %s628, 128
        $region64: #{tpu_custom_call.1} parent=55 // pred_fallthru
          _
        // Predicated region
        $region65: #{tpu_custom_call.1} parent=55 // pred_check
          %p633 = pneg %p191
        $region66: #{tpu_custom_call.1} parent=55 // pred_check_branch
          %635 = sbr.rel (%p633) target = $region68
        $region67: #{tpu_custom_call.1} parent=55 // pred_region
          %s636 = sand.u32 %s28, 1
          %s637 = scalar_lea.sflag [#allocation9], %s636
          %s638 = sand.u32 %s176, 1
          %s639 = smul.addr %s638, 8
          %s640 = scalar_lea.vmem [#allocation10], %s639
          %641 = dma.done %s637, 128
        $region68: #{tpu_custom_call.1} parent=55 // pred_fallthru
          _
      $region56: #{tpu_custom_call.1} parent=5 // pred_fallthru
        _
    $region6: #{tpu_custom_call.1} parent=1 // loop_footer
      %s26 = sadd.s32 1, %s22
    $region7: #{tpu_custom_call.1} parent=1 // loop_footer_branch
      %21 = sbr.rel target = $region3
    $region8: #{tpu_custom_call.1} parent=1 // loop_exit
      _
    %642 = vsyncpa [#allocation3], 1
    %s643 = scalar_lea.sflag [#allocation3], 1
    %644 = vsyncpa %s643, 1
    %645 = vsyncpa [#allocation6], 1
    %646 = vsyncpa [#allocation4], 1
    %s647 = scalar_lea.sflag [#allocation4], 1
    %648 = vsyncpa %s647, 1
    %649 = vsyncpa [#allocation9], 1
    %s650 = scalar_lea.sflag [#allocation9], 1
    %651 = vsyncpa %s650, 1

</llo_original>
